<compile_context>
chip_gen: v5e
topology: v5e:2x2
jax: 0.10.0
libtpu: 0.0.40
codegen_flags: <defaults>
</compile_context>

<pallas_src>
import functools

import jax
import jax.numpy as jnp
import numpy as np
from jax import lax
from jax.experimental import pallas as pl
from jax.experimental.pallas import tpu as pltpu

EPS = 1e-09
GAMMA = 0.3


def _fused_dft_basis(n_fft, padf):
    """Fused one-sided real-DFT basis, shape (n_fft, 2*padf) = [cos | -sin], zero-padded, bf16."""
    n_freq = n_fft // 2 + 1
    n = np.arange(n_fft, dtype=np.float64)[:, None]
    f = np.arange(n_freq, dtype=np.float64)[None, :]
    ang = 2.0 * np.pi * n * f / n_fft
    basis = np.zeros((n_fft, 2 * padf), dtype=np.float32)
    basis[:, :n_freq] = np.cos(ang)                      # Re basis
    basis[:, padf:padf + n_freq] = -np.sin(ang)          # Im basis (exp(-i*ang))
    return jnp.asarray(basis, dtype=jnp.bfloat16)


def _spec_loss_kernel(ro_ref, ho_ref, rt_ref, ht_ref, basis_ref, out_ref, *,
                      tile_frames, padf, inv_n_freq):
    tf = tile_frames
    basis = basis_ref[...]                               # (n_fft, 2*padf) bf16, reused for both signals

    def gamma_mag(main_ref, halo_ref):
        # (tf + 8, hop) bf16 hop-rows covering frames [f0, f0 + tf); frame f is the
        # concatenation of hop-rows f..f+3.  Shifted sublane slices are done on an f32
        # staging copy (odd offsets on packed bf16 risk expensive relayouts), then the
        # assembled (tf, n_fft) frame tile is cast to bf16 for one MXU matmul, keeping
        # the j-accumulation inside the MXU f32 accumulator.
        rows32 = jnp.concatenate([main_ref[...], halo_ref[...]], axis=0).astype(jnp.float32)
        frames32 = jnp.concatenate([rows32[j:j + tf, :] for j in range(4)], axis=1)
        frames = frames32.astype(jnp.bfloat16)           # (tf, n_fft) bf16
        acc = jnp.dot(frames, basis, preferred_element_type=jnp.float32)  # (tf, 2*padf) f32
        re = acc[:, :padf]                                # whole-vreg lane slices
        im = acc[:, padf:]
        # clip(|X|, EPS)**gamma == (max(re^2+im^2, EPS^2))**(gamma/2)  -- no sqrt (EUP only).
        p2 = jnp.maximum(re * re + im * im, EPS * EPS)
        return jnp.exp((0.5 * GAMMA) * jnp.log(p2))

    d = gamma_mag(rt_ref, ht_ref) - gamma_mag(ro_ref, ho_ref)

    # Mean over frequency on the MXU: contract the lane axis of both operands so the
    # per-chunk losses land lane-dense, shape (1, tf), frames along lanes.
    # (If a bundle audit ever shows this lowering via a materialized transpose, fall back
    # to jnp.sum(d*d, axis=-1) with a (tf, 1) store.)
    w = jnp.full((1, padf), inv_n_freq, dtype=jnp.float32)
    per_chunk = lax.dot_general(
        w, d * d, dimension_numbers=(((1,), (1,)), ((), ())),
        preferred_element_type=jnp.float32)               # (1, tf)

    # Broadcast along sublanes -> (8, tf) block: unmasked, (8,128)-friendly stores.
    out_ref[...] = jnp.broadcast_to(per_chunk, (8, tf))


def spectrogram_loss(output, target, chunk_size=1024, tile_frames=512, out_dict=True):
    """Pallas implementation of SpectrogramLoss.forward (reduction=mean)."""
    assert output.shape == target.shape and output.ndim == 2, "expects (B, T) signals"
    assert chunk_size % 4 == 0
    B, T = output.shape
    n_fft = chunk_size
    hop = n_fft // 4
    n_freq = n_fft // 2 + 1
    assert T >= n_fft, "signal shorter than one STFT chunk"
    n_frames = 1 + (T - n_fft) // hop
    padf = ((n_freq + 127) // 128) * 128                  # freq bins padded to lane multiple

    # Frames per grid step: multiple of 8, no larger than the (rounded-up) frame count.
    tf = min(tile_frames, ((n_frames + 7) // 8) * 8)
    tf = max(8, (tf // 8) * 8)
    n_tiles = pl.cdiv(n_frames, tf)
    n_rows_pad = n_tiles * tf + 8                         # + 8-row halo for the last tile

    def to_rows(x):
        # (B, T) -> (B, n_rows_pad, hop) non-overlapping bf16 hop rows (no gather, no 4x blowup).
        rows = x[:, :(n_frames + 3) * hop].astype(jnp.bfloat16).reshape(B, n_frames + 3, hop)
        return jnp.pad(rows, ((0, 0), (0, n_rows_pad - (n_frames + 3)), (0, 0)))

    rows_o = to_rows(output)
    rows_t = to_rows(target)
    basis = _fused_dft_basis(n_fft, padf)                 # (n_fft, 2*padf) bf16

    main_spec = pl.BlockSpec((pl.Squeezed(), tf, hop), lambda b, i: (b, i, 0))
    halo_spec = pl.BlockSpec((pl.Squeezed(), 8, hop),
                             lambda b, i: (b, (i + 1) * (tf // 8), 0))
    # Constant operand: fetched once, single-buffered (no wasted second pipeline buffer).
    basis_spec = pl.BlockSpec((n_fft, 2 * padf), lambda b, i: (0, 0),
                              pipeline_mode=pl.Buffered(1))
    out_spec = pl.BlockSpec((pl.Squeezed(), pl.Squeezed(), 8, tf),
                            lambda b, i: (b, i, 0, 0))

    kernel = functools.partial(_spec_loss_kernel, tile_frames=tf, padf=padf,
                               inv_n_freq=1.0 / n_freq)

    per_chunk = pl.pallas_call(
        kernel,
        out_shape=jax.ShapeDtypeStruct((B, n_tiles, 8, tf), jnp.float32),
        grid_spec=pltpu.PrefetchScalarGridSpec(
            num_scalar_prefetch=0,
            grid=(B, n_tiles),
            in_specs=[main_spec, halo_spec, main_spec, halo_spec, basis_spec],
            out_specs=out_spec,
        ),
        compiler_params=pltpu.CompilerParams(
            # Both axes parallel: B * n_tiles steps split across v7x's two TensorCores.
            dimension_semantics=("parallel", "parallel"),
            vmem_limit_bytes=32 * 1024 * 1024),
    )(rows_o, rows_o, rows_t, rows_t, basis)

    # Row 0 of the 8-way sublane broadcast holds the per-chunk (per-frame) losses.
    loss_per_chunk = per_chunk[:, :, 0, :].reshape(B, n_tiles * tf)[:, :n_frames]
    loss_per_element = jnp.mean(loss_per_chunk, axis=-1)  # mean over frames
    loss = jnp.mean(loss_per_element)                     # mean over batch
    return {"SpectrogramLoss": loss} if out_dict else loss


def _reference(output, target, chunk_size):
    """Pure-JAX f32 reference of the same math (explicit framing, literal clip/sqrt/pow)."""
    n_fft = chunk_size
    hop = n_fft // 4
    n_freq = n_fft // 2 + 1
    n = np.arange(n_fft, dtype=np.float64)[:, None]
    f = np.arange(n_freq, dtype=np.float64)[None, :]
    ang = 2.0 * np.pi * n * f / n_fft
    cos_m = jnp.asarray(np.cos(ang), dtype=jnp.float32)
    sin_m = jnp.asarray(-np.sin(ang), dtype=jnp.float32)

    B, T = output.shape
    n_frames = 1 + (T - n_fft) // hop
    idx = np.arange(n_frames)[:, None] * hop + np.arange(n_fft)[None, :]

    def mag(x):
        frames = x.astype(jnp.float32)[:, idx]            # (B, nF, n_fft)
        re = jnp.einsum("bfn,nk->bfk", frames, cos_m, precision=lax.Precision.HIGHEST)
        im = jnp.einsum("bfn,nk->bfk", frames, sin_m, precision=lax.Precision.HIGHEST)
        return jnp.maximum(jnp.sqrt(re * re + im * im), EPS)

    d = mag(target) ** GAMMA - mag(output) ** GAMMA
    loss_per_chunk = jnp.mean(d ** 2, axis=-1)            # mean over freq
    return jnp.mean(jnp.mean(loss_per_chunk, axis=-1))    # frames, then batch


if __name__ == "__main__":
    key = jax.random.PRNGKey(0)
    k1, k2 = jax.random.split(key)

    # Small, forward-consistent shapes: batch=2 1-D signals, chunk_size=64, hop=16,
    # T = 64 + 16*15 = 304  ->  16 STFT frames per signal, 33 frequency bins.
    B, chunk_size = 2, 64
    hop = chunk_size // 4
    T = chunk_size + hop * 15
    output = jax.random.normal(k1, (B, T), dtype=jnp.float32)
    target = jax.random.normal(k2, (B, T), dtype=jnp.float32)

    result = spectrogram_loss(output, target, chunk_size=chunk_size)
    loss = jax.block_until_ready(result["SpectrogramLoss"])

    # Tolerance reflects bf16 MXU operands (signal + DFT basis) vs. the full-f32 reference;
    # typical observed error is O(1e-3) relative, structural bugs show up as O(10%+).
    ref = jax.block_until_ready(_reference(output, target, chunk_size))
    np.testing.assert_allclose(np.asarray(loss), np.asarray(ref), rtol=1e-2, atol=1e-4)

    print("KERNEL_OK")
</pallas_src>

<mosaic_0001>
module attributes {stable_mosaic.version = 11 : i64} {
  func.func @_spec_loss_kernel(%arg0: i32, %arg1: i32, %arg2: memref<1x16x16xbf16, #tpu.memory_space<vmem>>, %arg3: memref<1x8x16xbf16, #tpu.memory_space<vmem>>, %arg4: memref<1x16x16xbf16, #tpu.memory_space<vmem>>, %arg5: memref<1x8x16xbf16, #tpu.memory_space<vmem>>, %arg6: memref<64x256xbf16, #tpu.memory_space<vmem>>, %arg7: memref<1x1x8x16xf32, #tpu.memory_space<vmem>>) attributes {dimension_semantics = [#tpu.dimension_semantics<parallel>, #tpu.dimension_semantics<parallel>], iteration_bounds = array<i64: 2, 1>, scalar_prefetch = 0 : i64, scratch_operands = 0 : i64, tpu.core_type = #tpu.core_type<tc>, window_params = [{transform_indices = @transform_0, window_bounds = array<i64: 1, 16, 16>}, {transform_indices = @transform_1, window_bounds = array<i64: 1, 8, 16>}, {transform_indices = @transform_2, window_bounds = array<i64: 1, 16, 16>}, {transform_indices = @transform_3, window_bounds = array<i64: 1, 8, 16>}, {pipeline_mode = #tpu.pipeline_mode<synchronous>, transform_indices = @transform_4, window_bounds = array<i64: 64, 256>}, {transform_indices = @transform_5, window_bounds = array<i64: 1, 1, 8, 16>}]} {
    %c0 = arith.constant 0 : index
    %c0_0 = arith.constant 0 : index
    %0 = vector.load %arg6[%c0, %c0_0] : memref<64x256xbf16, #tpu.memory_space<vmem>>, vector<64x256xbf16>
    %c0_1 = arith.constant 0 : index
    %c0_2 = arith.constant 0 : index
    %c0_3 = arith.constant 0 : index
    %1 = vector.load %arg4[%c0_1, %c0_2, %c0_3] : memref<1x16x16xbf16, #tpu.memory_space<vmem>>, vector<1x16x16xbf16>
    %2 = vector.shape_cast %1 : vector<1x16x16xbf16> to vector<16x16xbf16>
    %c0_4 = arith.constant 0 : index
    %c0_5 = arith.constant 0 : index
    %c0_6 = arith.constant 0 : index
    %3 = vector.load %arg5[%c0_4, %c0_5, %c0_6] : memref<1x8x16xbf16, #tpu.memory_space<vmem>>, vector<1x8x16xbf16>
    %4 = vector.shape_cast %3 : vector<1x8x16xbf16> to vector<8x16xbf16>
    %5 = tpu.concatenate %2, %4 in 0 : vector<16x16xbf16>, vector<8x16xbf16> -> vector<24x16xbf16>
    %6 = arith.extf %5 : vector<24x16xbf16> to vector<24x16xf32>
    %7 = vector.extract_strided_slice %6 {offsets = [0, 0], sizes = [16, 16], strides = [1, 1]} : vector<24x16xf32> to vector<16x16xf32>
    %8 = vector.extract_strided_slice %6 {offsets = [1, 0], sizes = [16, 16], strides = [1, 1]} : vector<24x16xf32> to vector<16x16xf32>
    %9 = vector.extract_strided_slice %6 {offsets = [2, 0], sizes = [16, 16], strides = [1, 1]} : vector<24x16xf32> to vector<16x16xf32>
    %10 = vector.extract_strided_slice %6 {offsets = [3, 0], sizes = [16, 16], strides = [1, 1]} : vector<24x16xf32> to vector<16x16xf32>
    %11 = tpu.concatenate %7, %8, %9, %10 in 1 : vector<16x16xf32>, vector<16x16xf32>, vector<16x16xf32>, vector<16x16xf32> -> vector<16x64xf32>
    %12 = arith.truncf %11 : vector<16x64xf32> to vector<16x64xbf16>
    %cst = arith.constant dense<0.000000e+00> : vector<16x256xf32>
    %13 = tpu.matmul %12, %0, %cst {dimension_numbers = #tpu.dot_dimension_numbers<[1], [0], [0], [1], [0, 0, 1, 1], [], []>} : vector<16x64xbf16>, vector<64x256xbf16>, vector<16x256xf32> -> vector<16x256xf32>
    %14 = vector.extract_strided_slice %13 {offsets = [0, 0], sizes = [16, 128], strides = [1, 1]} : vector<16x256xf32> to vector<16x128xf32>
    %15 = vector.extract_strided_slice %13 {offsets = [0, 128], sizes = [16, 128], strides = [1, 1]} : vector<16x256xf32> to vector<16x128xf32>
    %16 = arith.mulf %14, %14 : vector<16x128xf32>
    %17 = arith.mulf %15, %15 : vector<16x128xf32>
    %18 = arith.addf %16, %17 : vector<16x128xf32>
    %cst_7 = arith.constant 1.000000e-18 : f32
    %19 = vector.broadcast %cst_7 : f32 to vector<16x128xf32>
    %20 = arith.maximumf %18, %19 : vector<16x128xf32>
    %21 = math.log %20 : vector<16x128xf32>
    %cst_8 = arith.constant 1.500000e-01 : f32
    %22 = vector.broadcast %cst_8 : f32 to vector<16x128xf32>
    %23 = arith.mulf %22, %21 : vector<16x128xf32>
    %24 = math.exp %23 : vector<16x128xf32>
    %c0_9 = arith.constant 0 : index
    %c0_10 = arith.constant 0 : index
    %c0_11 = arith.constant 0 : index
    %25 = vector.load %arg2[%c0_9, %c0_10, %c0_11] : memref<1x16x16xbf16, #tpu.memory_space<vmem>>, vector<1x16x16xbf16>
    %26 = vector.shape_cast %25 : vector<1x16x16xbf16> to vector<16x16xbf16>
    %c0_12 = arith.constant 0 : index
    %c0_13 = arith.constant 0 : index
    %c0_14 = arith.constant 0 : index
    %27 = vector.load %arg3[%c0_12, %c0_13, %c0_14] : memref<1x8x16xbf16, #tpu.memory_space<vmem>>, vector<1x8x16xbf16>
    %28 = vector.shape_cast %27 : vector<1x8x16xbf16> to vector<8x16xbf16>
    %29 = tpu.concatenate %26, %28 in 0 : vector<16x16xbf16>, vector<8x16xbf16> -> vector<24x16xbf16>
    %30 = arith.extf %29 : vector<24x16xbf16> to vector<24x16xf32>
    %31 = vector.extract_strided_slice %30 {offsets = [0, 0], sizes = [16, 16], strides = [1, 1]} : vector<24x16xf32> to vector<16x16xf32>
    %32 = vector.extract_strided_slice %30 {offsets = [1, 0], sizes = [16, 16], strides = [1, 1]} : vector<24x16xf32> to vector<16x16xf32>
    %33 = vector.extract_strided_slice %30 {offsets = [2, 0], sizes = [16, 16], strides = [1, 1]} : vector<24x16xf32> to vector<16x16xf32>
    %34 = vector.extract_strided_slice %30 {offsets = [3, 0], sizes = [16, 16], strides = [1, 1]} : vector<24x16xf32> to vector<16x16xf32>
    %35 = tpu.concatenate %31, %32, %33, %34 in 1 : vector<16x16xf32>, vector<16x16xf32>, vector<16x16xf32>, vector<16x16xf32> -> vector<16x64xf32>
    %36 = arith.truncf %35 : vector<16x64xf32> to vector<16x64xbf16>
    %cst_15 = arith.constant dense<0.000000e+00> : vector<16x256xf32>
    %37 = tpu.matmul %36, %0, %cst_15 {dimension_numbers = #tpu.dot_dimension_numbers<[1], [0], [0], [1], [0, 0, 1, 1], [], []>} : vector<16x64xbf16>, vector<64x256xbf16>, vector<16x256xf32> -> vector<16x256xf32>
    %38 = vector.extract_strided_slice %37 {offsets = [0, 0], sizes = [16, 128], strides = [1, 1]} : vector<16x256xf32> to vector<16x128xf32>
    %39 = vector.extract_strided_slice %37 {offsets = [0, 128], sizes = [16, 128], strides = [1, 1]} : vector<16x256xf32> to vector<16x128xf32>
    %40 = arith.mulf %38, %38 : vector<16x128xf32>
    %41 = arith.mulf %39, %39 : vector<16x128xf32>
    %42 = arith.addf %40, %41 : vector<16x128xf32>
    %cst_16 = arith.constant 1.000000e-18 : f32
    %43 = vector.broadcast %cst_16 : f32 to vector<16x128xf32>
    %44 = arith.maximumf %42, %43 : vector<16x128xf32>
    %45 = math.log %44 : vector<16x128xf32>
    %cst_17 = arith.constant 1.500000e-01 : f32
    %46 = vector.broadcast %cst_17 : f32 to vector<16x128xf32>
    %47 = arith.mulf %46, %45 : vector<16x128xf32>
    %48 = math.exp %47 : vector<16x128xf32>
    %49 = arith.subf %24, %48 : vector<16x128xf32>
    %cst_18 = arith.constant 0.0303030312 : f32
    %50 = vector.broadcast %cst_18 : f32 to vector<1x128xf32>
    %51 = arith.mulf %49, %49 : vector<16x128xf32>
    %cst_19 = arith.constant dense<0.000000e+00> : vector<1x16xf32>
    %52 = tpu.matmul %50, %51, %cst_19 {dimension_numbers = #tpu.dot_dimension_numbers<[1], [1], [0], [0], [0, 0, 1, 0], [], []>} : vector<1x128xf32>, vector<16x128xf32>, vector<1x16xf32> -> vector<1x16xf32>
    %53 = vector.shape_cast %52 : vector<1x16xf32> to vector<1x16xf32>
    %54 = vector.broadcast %53 : vector<1x16xf32> to vector<8x16xf32>
    %c0_20 = arith.constant 0 : index
    %c0_21 = arith.constant 0 : index
    %c0_22 = arith.constant 0 : index
    %c0_23 = arith.constant 0 : index
    %55 = vector.load %arg7[%c0_20, %c0_21, %c0_22, %c0_23] : memref<1x1x8x16xf32, #tpu.memory_space<vmem>>, vector<1x1x8x16xf32>
    %56 = vector.shape_cast %55 : vector<1x1x8x16xf32> to vector<8x16xf32>
    %57 = vector.shape_cast %54 : vector<8x16xf32> to vector<1x1x8x16xf32>
    tpu.vector_store %arg7[%c0_20, %c0_21, %c0_22, %c0_23], %57 {strides = array<i32>} : memref<1x1x8x16xf32, #tpu.memory_space<vmem>>, vector<1x1x8x16xf32>,
    return
  }
  func.func @transform_0(%arg0: i32, %arg1: i32) -> (i32, i32, i32) {
    %c0_i32 = arith.constant 0 : i32
    %c0_i32_0 = arith.constant 0 : i32
    return %arg0, %arg1, %c0_i32 : i32, i32, i32
  }
  func.func @transform_1(%arg0: i32, %arg1: i32) -> (i32, i32, i32) {
    %c1_i32 = arith.constant 1 : i32
    %0 = arith.addi %arg1, %c1_i32 : i32
    %c2_i32 = arith.constant 2 : i32
    %1 = arith.muli %0, %c2_i32 : i32
    %c0_i32 = arith.constant 0 : i32
    %c0_i32_0 = arith.constant 0 : i32
    return %arg0, %1, %c0_i32 : i32, i32, i32
  }
  func.func @transform_2(%arg0: i32, %arg1: i32) -> (i32, i32, i32) {
    %c0_i32 = arith.constant 0 : i32
    %c0_i32_0 = arith.constant 0 : i32
    return %arg0, %arg1, %c0_i32 : i32, i32, i32
  }
  func.func @transform_3(%arg0: i32, %arg1: i32) -> (i32, i32, i32) {
    %c1_i32 = arith.constant 1 : i32
    %0 = arith.addi %arg1, %c1_i32 : i32
    %c2_i32 = arith.constant 2 : i32
    %1 = arith.muli %0, %c2_i32 : i32
    %c0_i32 = arith.constant 0 : i32
    %c0_i32_0 = arith.constant 0 : i32
    return %arg0, %1, %c0_i32 : i32, i32, i32
  }
  func.func @transform_4(%arg0: i32, %arg1: i32) -> (i32, i32) {
    %c0_i32 = arith.constant 0 : i32
    %c0_i32_0 = arith.constant 0 : i32
    %c0_i32_1 = arith.constant 0 : i32
    return %c0_i32, %c0_i32_0 : i32, i32
  }
  func.func @transform_5(%arg0: i32, %arg1: i32) -> (i32, i32, i32, i32) {
    %c0_i32 = arith.constant 0 : i32
    %c0_i32_0 = arith.constant 0 : i32
    %c0_i32_1 = arith.constant 0 : i32
    return %arg0, %arg1, %c0_i32, %c0_i32_0 : i32, i32, i32, i32
  }
}

</mosaic_0001>

<llo_original>
// kernel: tpu_custom_call.1
$region0: #{tpu_custom_call.1}
  #allocation0 [shape = 'u32[]', space=smem, size = 0x4, offset = 0x4, fixed_abs, tag = 'smem constant byte address 0x4 - core index']
  #allocation1 [shape = 'u32[72,128]{1,0:T(1,128)}', space=vmem, size = 0x9000, scoped, tag = 'internal scratch']
  %s0 = inlined_call_operand.vmem [shape: bf16[2,24,16], index: 0, kind: input, shape index: {}]
  %s1 = inlined_call_operand.vmem [shape: bf16[2,24,16], index: 1, kind: input, shape index: {}]
  %s2 = inlined_call_operand.vmem [shape: bf16[2,24,16], index: 2, kind: input, shape index: {}]
  %s3 = inlined_call_operand.vmem [shape: bf16[2,24,16], index: 3, kind: input, shape index: {}]
  %s4 = inlined_call_operand.vmem [shape: bf16[64,256], index: 4, kind: input, shape index: {}]
  %s5 = inlined_call_operand.hbm [shape: f32[2,1,8,16], index: 5, kind: output, shape index: {}]
  %s6 = sld [smem:[#allocation0]]
  $region53: #{tpu_custom_call.1} parent=0
    _
  %s8 = ssub.s32 1, %s6
  %s9 = scalar_select 0, %s8, %s6
  $region1: #{tpu_custom_call.1} parent=0
    #allocation2 [shape = 'u8[8192]{0}', space=vmem, size = 0x2000, scoped, tag = 'output window, operand 0']
    #allocation3 [shape = 's32[2]{0}', space=sflag, size = 0x8, scoped, tag = 'scoped memory for tpu_custom_call.1']
    %10 = vsyncpa [#allocation3], 0
    %s11 = scalar_lea.sflag [#allocation3], 1
    %12 = vsyncpa %s11, 0
    loop: start=0, step=1, limit=4
    $region2: #{tpu_custom_call.1} parent=1 // loop_pre_header
      _
    $region3: #{tpu_custom_call.1} parent=1 // loop_header
      %s14 = sphi 0, %s18
      %p15 = scmp.ge.s32.totalorder %s14, 4
      %s21 = sphi 0, %s33
      %s22 = sphi 0, %s29
      %s23 = sphi 0, %s21
      %s24 = sphi 0, %s22
      %s25 = sphi 0, %s23
      %s26 = sphi 0, %s24
      %s38 = sphi 0, %s40
      %s41 = sphi 0, %s38
      %s42 = sphi 0, %s41
      %s58 = sphi 0, %s42
      %s70 = sphi 0, %s72
      %s73 = sphi 0, %s70
      %s74 = sphi 0, %s73
      %s90 = sphi 0, %s74
      %s98 = sphi 0, %s100
      %s101 = sphi 0, %s98
      %s102 = sphi 0, %s101
      %s118 = sphi 0, %s102
      %s130 = sphi 0, %s132
      %s133 = sphi 0, %s130
      %s134 = sphi 0, %s133
      %s150 = sphi 0, %s134
      %s154 = sphi 0, %s154
      %s156 = sphi 0, %s154
      %s157 = sphi 0, %s156
      %s171 = sphi 0, %s157
      %s179 = sphi 0, %s181
      %s182 = sphi 0, %s179
      %s183 = sphi 0, %s182
      %s199 = sphi 0, %s183
    $region4: #{tpu_custom_call.1} parent=1 // loop_header_branch
      %17 = sbr.rel (%p15) target = $region8
    $region5: #{tpu_custom_call.1} parent=1 // loop_body
      %s19 = ssub.s32 %s14, 1
      %s20 = ssub.s32 %s14, 2
      %s27 = sadd.s32 1, %s22
      %p28 = scmp.ge.s32.totalorder %s27, 1
      %s29 = scalar_select %p28, 0, %s27
      %s30 = sadd.s32 1, %s21
      %s31 = scalar_select %p28, %s30, %s21
      %p32 = scmp.ge.s32.totalorder %s31, 2
      %s33 = scalar_select %p32, 0, %s31
      %s34 = ssub.s32 %s21, %s33
      %s35 = ssub.s32 %s22, %s29
      %s36 = sor.u32 %s34, %s35
      %p37 = scmp.eq.s32.totalorder %s36, 0
      %s39 = sadd.s32 %s38, 1
      %s40 = scalar_select %p37, %s38, %s39
      %p43 = pneg %p37
      %p44 = scmp.eq.s32.totalorder %s14, 1
      %p45 = por %p43, %p44
      %p46 = scmp.ne.s32.totalorder %s38, %s41
      %p47 = scmp.eq.s32.totalorder %s14, 0
      %p48 = por %p46, %p47
      %p49 = scmp.ne.s32.totalorder %s38, %s41
      %p50 = scmp.eq.s32.totalorder %s19, 1
      %p51 = por %p49, %p50
      %p52 = scmp.ne.s32.totalorder %s41, %s42
      %p53 = scmp.eq.s32.totalorder %s19, 0
      %p54 = por %p52, %p53
      %p55 = scmp.ne.s32.totalorder %s41, %s42
      %p56 = scmp.eq.s32.totalorder %s20, 1
      %p57 = por %p55, %p56
      %p59 = scmp.ne.s32.totalorder %s42, %s58
      %p60 = scmp.eq.s32.totalorder %s20, 0
      %p61 = por %p59, %p60
      %s62 = sadd.s32 %s22, 1
      %s63 = smul.u32 %s62, 2
      %s64 = sadd.s32 %s29, 1
      %s65 = smul.u32 %s64, 2
      %s66 = ssub.s32 %s21, %s33
      %s67 = ssub.s32 %s63, %s65
      %s68 = sor.u32 %s66, %s67
      %p69 = scmp.eq.s32.totalorder %s68, 0
      %s71 = sadd.s32 %s70, 1
      %s72 = scalar_select %p69, %s70, %s71
      %p75 = pneg %p69
      %p76 = scmp.eq.s32.totalorder %s14, 1
      %p77 = por %p75, %p76
      %p78 = scmp.ne.s32.totalorder %s70, %s73
      %p79 = scmp.eq.s32.totalorder %s14, 0
      %p80 = por %p78, %p79
      %p81 = scmp.ne.s32.totalorder %s70, %s73
      %p82 = scmp.eq.s32.totalorder %s19, 1
      %p83 = por %p81, %p82
      %p84 = scmp.ne.s32.totalorder %s73, %s74
      %p85 = scmp.eq.s32.totalorder %s19, 0
      %p86 = por %p84, %p85
      %p87 = scmp.ne.s32.totalorder %s73, %s74
      %p88 = scmp.eq.s32.totalorder %s20, 1
      %p89 = por %p87, %p88
      %p91 = scmp.ne.s32.totalorder %s74, %s90
      %p92 = scmp.eq.s32.totalorder %s20, 0
      %p93 = por %p91, %p92
      %s94 = ssub.s32 %s21, %s33
      %s95 = ssub.s32 %s22, %s29
      %s96 = sor.u32 %s94, %s95
      %p97 = scmp.eq.s32.totalorder %s96, 0
      %s99 = sadd.s32 %s98, 1
      %s100 = scalar_select %p97, %s98, %s99
      %p103 = pneg %p97
      %p104 = scmp.eq.s32.totalorder %s14, 1
      %p105 = por %p103, %p104
      %p106 = scmp.ne.s32.totalorder %s98, %s101
      %p107 = scmp.eq.s32.totalorder %s14, 0
      %p108 = por %p106, %p107
      %p109 = scmp.ne.s32.totalorder %s98, %s101
      %p110 = scmp.eq.s32.totalorder %s19, 1
      %p111 = por %p109, %p110
      %p112 = scmp.ne.s32.totalorder %s101, %s102
      %p113 = scmp.eq.s32.totalorder %s19, 0
      %p114 = por %p112, %p113
      %p115 = scmp.ne.s32.totalorder %s101, %s102
      %p116 = scmp.eq.s32.totalorder %s20, 1
      %p117 = por %p115, %p116
      %p119 = scmp.ne.s32.totalorder %s102, %s118
      %p120 = scmp.eq.s32.totalorder %s20, 0
      %p121 = por %p119, %p120
      %s122 = sadd.s32 %s22, 1
      %s123 = smul.u32 %s122, 2
      %s124 = sadd.s32 %s29, 1
      %s125 = smul.u32 %s124, 2
      %s126 = ssub.s32 %s21, %s33
      %s127 = ssub.s32 %s123, %s125
      %s128 = sor.u32 %s126, %s127
      %p129 = scmp.eq.s32.totalorder %s128, 0
      %s131 = sadd.s32 %s130, 1
      %s132 = scalar_select %p129, %s130, %s131
      %p135 = pneg %p129
      %p136 = scmp.eq.s32.totalorder %s14, 1
      %p137 = por %p135, %p136
      %p138 = scmp.ne.s32.totalorder %s130, %s133
      %p139 = scmp.eq.s32.totalorder %s14, 0
      %p140 = por %p138, %p139
      %p141 = scmp.ne.s32.totalorder %s130, %s133
      %p142 = scmp.eq.s32.totalorder %s19, 1
      %p143 = por %p141, %p142
      %p144 = scmp.ne.s32.totalorder %s133, %s134
      %p145 = scmp.eq.s32.totalorder %s19, 0
      %p146 = por %p144, %p145
      %p147 = scmp.ne.s32.totalorder %s133, %s134
      %p148 = scmp.eq.s32.totalorder %s20, 1
      %p149 = por %p147, %p148
      %p151 = scmp.ne.s32.totalorder %s134, %s150
      %p152 = scmp.eq.s32.totalorder %s20, 0
      %p153 = por %p151, %p152
      %s155 = sadd.s32 %s154, 1
      %p158 = scmp.eq.s32.totalorder %s14, 1
      %p159 = scmp.ne.s32.totalorder %s154, %s156
      %p160 = scmp.eq.s32.totalorder %s14, 0
      %p161 = por %p159, %p160
      %p162 = scmp.ne.s32.totalorder %s154, %s156
      %p163 = scmp.eq.s32.totalorder %s19, 1
      %p164 = por %p162, %p163
      %p165 = scmp.ne.s32.totalorder %s156, %s157
      %p166 = scmp.eq.s32.totalorder %s19, 0
      %p167 = por %p165, %p166
      %p168 = scmp.ne.s32.totalorder %s156, %s157
      %p169 = scmp.eq.s32.totalorder %s20, 1
      %p170 = por %p168, %p169
      %p172 = scmp.ne.s32.totalorder %s157, %s171
      %p173 = scmp.eq.s32.totalorder %s20, 0
      %p174 = por %p172, %p173
      %s175 = ssub.s32 %s21, %s33
      %s176 = ssub.s32 %s22, %s29
      %s177 = sor.u32 %s175, %s176
      %p178 = scmp.eq.s32.totalorder %s177, 0
      %s180 = sadd.s32 %s179, 1
      %s181 = scalar_select %p178, %s179, %s180
      %p184 = pneg %p178
      %p185 = scmp.eq.s32.totalorder %s14, 1
      %p186 = por %p184, %p185
      %p187 = scmp.ne.s32.totalorder %s179, %s182
      %p188 = scmp.eq.s32.totalorder %s14, 0
      %p189 = por %p187, %p188
      %p190 = scmp.ne.s32.totalorder %s179, %s182
      %p191 = scmp.eq.s32.totalorder %s19, 1
      %p192 = por %p190, %p191
      %p193 = scmp.ne.s32.totalorder %s182, %s183
      %p194 = scmp.eq.s32.totalorder %s19, 0
      %p195 = por %p193, %p194
      %p196 = scmp.ne.s32.totalorder %s182, %s183
      %p197 = scmp.eq.s32.totalorder %s20, 1
      %p198 = por %p196, %p197
      %p200 = scmp.ne.s32.totalorder %s183, %s199
      %p201 = scmp.eq.s32.totalorder %s20, 0
      %p202 = por %p200, %p201
      %p203 = scmp.le.s32.totalorder 1, %s14
      %p204 = scmp.lt.s32.totalorder %s14, 3
      %p205 = pnand %p203, %p204
      %p206 = pneg %p205
      // Predicated region
      $region9: #{tpu_custom_call.1} parent=5 // pred_check
        _
      $region10: #{tpu_custom_call.1} parent=5 // pred_check_branch
        %208 = sbr.rel (%p205) target = $region12
      $region11: #{tpu_custom_call.1} parent=5 // pred_region
        %s209 = ssub.s32 %s14, 1
        // Predicated region
        $region13: #{tpu_custom_call.1} parent=11 // pred_check
          %p210 = pneg %p167
        $region14: #{tpu_custom_call.1} parent=11 // pred_check_branch
          %212 = sbr.rel (%p210) target = $region16
        $region15: #{tpu_custom_call.1} parent=11 // pred_region
          _
        $region16: #{tpu_custom_call.1} parent=11 // pred_fallthru
          _
      $region12: #{tpu_custom_call.1} parent=5 // pred_fallthru
        _
      %p213 = scmp.lt.s32.totalorder %s14, 2
      // Predicated region
      $region17: #{tpu_custom_call.1} parent=5 // pred_check
        %p214 = pneg %p213
      $region18: #{tpu_custom_call.1} parent=5 // pred_check_branch
        %216 = sbr.rel (%p214) target = $region20
      $region19: #{tpu_custom_call.1} parent=5 // pred_region
        // Predicated region
        $region21: #{tpu_custom_call.1} parent=19 // pred_check
          %p217 = pneg %p48
        $region22: #{tpu_custom_call.1} parent=19 // pred_check_branch
          %219 = sbr.rel (%p217) target = $region24
        $region23: #{tpu_custom_call.1} parent=19 // pred_region
          %s220 = smul.u32 2, %s22
          %s221 = ssub.s32 3, %s220
          %p222 = scmp.lt.s32.totalorder %s221, 2
          %s223 = scalar_select %p222, %s221, 2
          %s224 = smul.u32 4, %s223
          %p225 = scmp.lt.s32.totalorder %s21, 1
          %s226 = scalar_select %p225, %s21, 1
          %p227 = scmp.lt.s32.totalorder %s220, 2
          %s228 = scalar_select %p227, %s220, 2
          %s229 = smul.addr %s226, 3
          %s230 = sadd.s32 %s228, %s229
          %s231 = smul.addr %s230, 4
          %s232 = scalar_lea.vmem %s0, %s231
          %s233 = smul.u32 2, %s22
          %s234 = ssub.s32 3, %s233
          %p235 = scmp.lt.s32.totalorder %s234, 2
          %s236 = scalar_select %p235, %s234, 2
          %s237 = smul.u32 4, %s236
        $region24: #{tpu_custom_call.1} parent=19 // pred_fallthru
          _
        // Predicated region
        $region25: #{tpu_custom_call.1} parent=19 // pred_check
          %p238 = pneg %p80
        $region26: #{tpu_custom_call.1} parent=19 // pred_check_branch
          %240 = sbr.rel (%p238) target = $region28
        $region27: #{tpu_custom_call.1} parent=19 // pred_region
          %s241 = sadd.s32 %s22, 1
          %s242 = smul.u32 %s241, 2
          %p243 = scmp.lt.s32.totalorder %s21, 1
          %s244 = scalar_select %p243, %s21, 1
          %p245 = scmp.lt.s32.totalorder %s242, 2
          %s246 = scalar_select %p245, %s242, 2
          %s247 = smul.addr %s244, 3
          %s248 = sadd.s32 %s246, %s247
          %s249 = smul.addr %s248, 4
          %s250 = scalar_lea.vmem %s1, %s249
          %s251 = sadd.s32 %s22, 1
          %s252 = smul.u32 %s251, 2
        $region28: #{tpu_custom_call.1} parent=19 // pred_fallthru
          _
        // Predicated region
        $region29: #{tpu_custom_call.1} parent=19 // pred_check
          %p253 = pneg %p108
        $region30: #{tpu_custom_call.1} parent=19 // pred_check_branch
          %255 = sbr.rel (%p253) target = $region32
        $region31: #{tpu_custom_call.1} parent=19 // pred_region
          %s256 = smul.u32 2, %s22
          %s257 = ssub.s32 3, %s256
          %p258 = scmp.lt.s32.totalorder %s257, 2
          %s259 = scalar_select %p258, %s257, 2
          %s260 = smul.u32 4, %s259
          %p261 = scmp.lt.s32.totalorder %s21, 1
          %s262 = scalar_select %p261, %s21, 1
          %p263 = scmp.lt.s32.totalorder %s256, 2
          %s264 = scalar_select %p263, %s256, 2
          %s265 = smul.addr %s262, 3
          %s266 = sadd.s32 %s264, %s265
          %s267 = smul.addr %s266, 4
          %s268 = scalar_lea.vmem %s2, %s267
          %s269 = smul.u32 2, %s22
          %s270 = ssub.s32 3, %s269
          %p271 = scmp.lt.s32.totalorder %s270, 2
          %s272 = scalar_select %p271, %s270, 2
          %s273 = smul.u32 4, %s272
        $region32: #{tpu_custom_call.1} parent=19 // pred_fallthru
          _
        // Predicated region
        $region33: #{tpu_custom_call.1} parent=19 // pred_check
          %p274 = pneg %p140
        $region34: #{tpu_custom_call.1} parent=19 // pred_check_branch
          %276 = sbr.rel (%p274) target = $region36
        $region35: #{tpu_custom_call.1} parent=19 // pred_region
          %s277 = sadd.s32 %s22, 1
          %s278 = smul.u32 %s277, 2
          %p279 = scmp.lt.s32.totalorder %s21, 1
          %s280 = scalar_select %p279, %s21, 1
          %p281 = scmp.lt.s32.totalorder %s278, 2
          %s282 = scalar_select %p281, %s278, 2
          %s283 = smul.addr %s280, 3
          %s284 = sadd.s32 %s282, %s283
          %s285 = smul.addr %s284, 4
          %s286 = scalar_lea.vmem %s3, %s285
          %s287 = sadd.s32 %s22, 1
          %s288 = smul.u32 %s287, 2
        $region36: #{tpu_custom_call.1} parent=19 // pred_fallthru
          _
      $region20: #{tpu_custom_call.1} parent=5 // pred_fallthru
        _
      %p289 = scmp.le.s32.totalorder 1, %s14
      %p290 = scmp.lt.s32.totalorder %s14, 3
      %p291 = pnand %p289, %p290
      %p292 = pneg %p291
      // Predicated region
      $region37: #{tpu_custom_call.1} parent=5 // pred_check
        _
      $region38: #{tpu_custom_call.1} parent=5 // pred_check_branch
        %294 = sbr.rel (%p291) target = $region40
      $region39: #{tpu_custom_call.1} parent=5 // pred_region
        %s295 = ssub.s32 %s14, 1
        %s296 = smul.u32 2, %s24
        %s297 = ssub.s32 3, %s296
        %p298 = scmp.lt.s32.totalorder %s297, 2
        %s299 = scalar_select %p298, %s297, 2
        %s300 = smul.u32 4, %s299
        %p301 = scmp.lt.s32.totalorder %s23, 1
        %s302 = scalar_select %p301, %s23, 1
        %p303 = scmp.lt.s32.totalorder %s296, 2
        %s304 = scalar_select %p303, %s296, 2
        %s305 = smul.addr %s302, 3
        %s306 = sadd.s32 %s304, %s305
        %s307 = smul.addr %s306, 4
        %s308 = scalar_lea.vmem %s0, %s307
        %p309 = pneg %p54
        %p310 = pneg %p51
        %s311 = sadd.s32 %s24, 1
        %s312 = smul.u32 %s311, 2
        %p313 = scmp.lt.s32.totalorder %s23, 1
        %s314 = scalar_select %p313, %s23, 1
        %p315 = scmp.lt.s32.totalorder %s312, 2
        %s316 = scalar_select %p315, %s312, 2
        %s317 = smul.addr %s314, 3
        %s318 = sadd.s32 %s316, %s317
        %s319 = smul.addr %s318, 4
        %s320 = scalar_lea.vmem %s1, %s319
        %p321 = pneg %p86
        %p322 = pneg %p83
        %s323 = smul.u32 2, %s24
        %s324 = ssub.s32 3, %s323
        %p325 = scmp.lt.s32.totalorder %s324, 2
        %s326 = scalar_select %p325, %s324, 2
        %s327 = smul.u32 4, %s326
        %p328 = scmp.lt.s32.totalorder %s23, 1
        %s329 = scalar_select %p328, %s23, 1
        %p330 = scmp.lt.s32.totalorder %s323, 2
        %s331 = scalar_select %p330, %s323, 2
        %s332 = smul.addr %s329, 3
        %s333 = sadd.s32 %s331, %s332
        %s334 = smul.addr %s333, 4
        %s335 = scalar_lea.vmem %s2, %s334
        %p336 = pneg %p114
        %p337 = pneg %p111
        %s338 = sadd.s32 %s24, 1
        %s339 = smul.u32 %s338, 2
        %p340 = scmp.lt.s32.totalorder %s23, 1
        %s341 = scalar_select %p340, %s23, 1
        %p342 = scmp.lt.s32.totalorder %s339, 2
        %s343 = scalar_select %p342, %s339, 2
        %s344 = smul.addr %s341, 3
        %s345 = sadd.s32 %s343, %s344
        %s346 = smul.addr %s345, 4
        %s347 = scalar_lea.vmem %s3, %s346
        %p348 = pneg %p146
        %p349 = pneg %p143
        %p350 = pneg %p167
        %p351 = pneg %p164
        %p352 = pneg %p195
        %p353 = pneg %p192
        %s354 = sand.u32 %s182, 1
        %s355 = scalar_lea.sflag [#allocation3], %s354
        %s356 = sand.u32 %s182, 1
        %s357 = smul.addr %s356, 8
        %s358 = scalar_lea.vmem [#allocation2], %s357
        %s359 = smul.u32 2, %s24
        %s360 = ssub.s32 3, %s359
        %p361 = scmp.lt.s32.totalorder %s360, 2
        %s362 = scalar_select %p361, %s360, 2
        %s363 = smul.u32 4, %s362
        %p364 = scmp.lt.s32.totalorder %s23, 1
        %s365 = scalar_select %p364, %s23, 1
        %p366 = scmp.lt.s32.totalorder %s359, 2
        %s367 = scalar_select %p366, %s359, 2
        %s368 = smul.addr %s365, 3
        %s369 = sadd.s32 %s367, %s368
        %s370 = smul.addr %s369, 4
        %s371 = scalar_lea.vmem %s0, %s370
        %s372 = smul.u32 2, %s24
        %s373 = ssub.s32 3, %s372
        %p374 = scmp.lt.s32.totalorder %s373, 2
        %s375 = scalar_select %p374, %s373, 2
        %s376 = smul.u32 4, %s375
        %s377 = sadd.s32 %s24, 1
        %s378 = smul.u32 %s377, 2
        %p379 = scmp.lt.s32.totalorder %s23, 1
        %s380 = scalar_select %p379, %s23, 1
        %p381 = scmp.lt.s32.totalorder %s378, 2
        %s382 = scalar_select %p381, %s378, 2
        %s383 = smul.addr %s380, 3
        %s384 = sadd.s32 %s382, %s383
        %s385 = smul.addr %s384, 4
        %s386 = scalar_lea.vmem %s1, %s385
        %s387 = sadd.s32 %s24, 1
        %s388 = smul.u32 %s387, 2
        %s389 = smul.u32 2, %s24
        %s390 = ssub.s32 3, %s389
        %p391 = scmp.lt.s32.totalorder %s390, 2
        %s392 = scalar_select %p391, %s390, 2
        %s393 = smul.u32 4, %s392
        %p394 = scmp.lt.s32.totalorder %s23, 1
        %s395 = scalar_select %p394, %s23, 1
        %p396 = scmp.lt.s32.totalorder %s389, 2
        %s397 = scalar_select %p396, %s389, 2
        %s398 = smul.addr %s395, 3
        %s399 = sadd.s32 %s397, %s398
        %s400 = smul.addr %s399, 4
        %s401 = scalar_lea.vmem %s2, %s400
        %s402 = smul.u32 2, %s24
        %s403 = ssub.s32 3, %s402
        %p404 = scmp.lt.s32.totalorder %s403, 2
        %s405 = scalar_select %p404, %s403, 2
        %s406 = smul.u32 4, %s405
        %s407 = sadd.s32 %s24, 1
        %s408 = smul.u32 %s407, 2
        %p409 = scmp.lt.s32.totalorder %s23, 1
        %s410 = scalar_select %p409, %s23, 1
        %p411 = scmp.lt.s32.totalorder %s408, 2
        %s412 = scalar_select %p411, %s408, 2
        %s413 = smul.addr %s410, 3
        %s414 = sadd.s32 %s412, %s413
        %s415 = smul.addr %s414, 4
        %s416 = scalar_lea.vmem %s3, %s415
        %s417 = sadd.s32 %s24, 1
        %s418 = smul.u32 %s417, 2
        %v420 = vld [vmem:[%s4] sm:$0xff]
        %v421 = vld [vmem:[%s4 + $0x8] sm:$0xff]
        %v422 = vld [vmem:[%s4 + $0x10] sm:$0xff]
        %v423 = vld [vmem:[%s4 + $0x18] sm:$0xff]
        %v424 = vld [vmem:[%s4 + $0x20] sm:$0xff]
        %v425 = vld [vmem:[%s4 + $0x28] sm:$0xff]
        %v426 = vld [vmem:[%s4 + $0x30] sm:$0xff]
        %v427 = vld [vmem:[%s4 + $0x38] sm:$0xff]
        %v428 = vld [vmem:[%s401] sm:$0xf]
        %v429 = vld [vmem:[%s401 + $0x4] sm:$0xf]
        %v430 = vld [vmem:[%s416] sm:$0xf]
        %v433 = vunpack.c.l.b16 %v428
        %v434 = vunpack.c.l.b16 %v429
        %v435 = vpack.c.b16 %v434, %v433
        %v437 = vunpack.c.l.bf16 %v435
        %v438 = vunpack.c.h.bf16 %v435
        %v439 = vunpack.c.l.bf16 %v430
        %vm443 = vcmask 1046528
        %v444 = vrot.slane %v437, 1
        %v445 = vrot.slane %v438, 1
        %v446 = vsel %vm443, %v444, %v445
        %v447 = vrot.slane %v439, 1
        %v448 = vsel %vm443, %v445, %v447
        %449 = vrot.lane.b32.xlu0 %v446, 16
        %v450 = vpop.permute.xlu0 %449
        %451 = vrot.lane.b32.xlu0 %v448, 16
        %v452 = vpop.permute.xlu0 %451
        %vm455 = vcmask 1045504
        %v456 = vrot.slane %v437, 2
        %v457 = vrot.slane %v438, 2
        %v458 = vsel %vm455, %v456, %v457
        %v459 = vrot.slane %v439, 2
        %v460 = vsel %vm455, %v457, %v459
        %461 = vrot.lane.b32.xlu0 %v458, 32
        %v462 = vpop.permute.xlu0 %461
        %463 = vrot.lane.b32.xlu0 %v460, 32
        %v464 = vpop.permute.xlu0 %463
        %vm467 = vcmask 1044480
        %v468 = vrot.slane %v437, 3
        %v469 = vrot.slane %v438, 3
        %v470 = vsel %vm467, %v468, %v469
        %v471 = vrot.slane %v439, 3
        %v472 = vsel %vm467, %v469, %v471
        %473 = vrot.lane.b32.xlu0 %v470, 48
        %v474 = vpop.permute.xlu0 %473
        %475 = vrot.lane.b32.xlu0 %v472, 48
        %v476 = vpop.permute.xlu0 %475
        %vm479 = vcmask 130048
        %v480 = vsel %vm479, %v437, %v450
        %v481 = vsel %vm479, %v438, %v452
        %vm482 = vcmask 261120
        %v483 = vsel %vm482, %v480, %v462
        %v484 = vsel %vm482, %v481, %v464
        %vm485 = vcmask 392192
        %v486 = vsel %vm485, %v483, %v474
        %v487 = vsel %vm485, %v484, %v476
        %v488 = vpack.c.bf16 %v487, %v486
        %v497 = vunpack.c.l.b16 %v420
        %v498 = vunpack.c.h.b16 %v420
        %v499 = vunpack.c.l.b16 %v421
        %v500 = vunpack.c.h.b16 %v421
        %v501 = vunpack.c.l.b16 %v422
        %v502 = vunpack.c.h.b16 %v422
        %v503 = vunpack.c.l.b16 %v423
        %v504 = vunpack.c.h.b16 %v423
        %v505 = vunpack.c.l.b16 %v424
        %v506 = vunpack.c.h.b16 %v424
        %v507 = vunpack.c.l.b16 %v425
        %v508 = vunpack.c.h.b16 %v425
        %v509 = vunpack.c.l.b16 %v426
        %v510 = vunpack.c.h.b16 %v426
        %v511 = vunpack.c.l.b16 %v427
        %v512 = vunpack.c.h.b16 %v427
        %v513 = vpack.c.b16 %v499, %v497
        %v514 = vpack.c.b16 %v500, %v498
        %v515 = vpack.c.b16 %v503, %v501
        %v516 = vpack.c.b16 %v504, %v502
        %v517 = vpack.c.b16 %v507, %v505
        %v518 = vpack.c.b16 %v508, %v506
        %v519 = vpack.c.b16 %v511, %v509
        %v520 = vpack.c.b16 %v512, %v510
        %vm529 = vcmask 523264
        %v531 = vsel %vm529, %v488, 0
        %533 = vmatpush.bf16.msra.mxu0 0
        %534 = vmatpush.bf16.msra.mxu0 0
        %535 = vmatpush.bf16.msra.mxu0 0
        %536 = vmatpush.bf16.msra.mxu0 0
        %537 = vmatpush.bf16.msra.mxu0 %v519
        %538 = vmatpush.bf16.msra.mxu0 %v517
        %539 = vmatpush.bf16.msra.mxu0 %v515
        %540 = vmatpush.bf16.msra.mxu0 %v513
        %541 = vmatmul.bf16.gmra.mxu0 %v531
        %v542 = vpop.f32.mrf.mxu0
        %v543 = vadd.f32 0.0, %v542
        %v544 = vpop.f32.mrf.mxu0
        %v545 = vadd.f32 0.0, %v544
        %546 = vdwg.mxu0
        %547 = vmatpush.bf16.msra.mxu0 0
        %548 = vmatpush.bf16.msra.mxu0 0
        %549 = vmatpush.bf16.msra.mxu0 0
        %550 = vmatpush.bf16.msra.mxu0 0
        %551 = vmatpush.bf16.msra.mxu0 %v520
        %552 = vmatpush.bf16.msra.mxu0 %v518
        %553 = vmatpush.bf16.msra.mxu0 %v516
        %554 = vmatpush.bf16.msra.mxu0 %v514
        %555 = vmatmul.bf16.gmra.mxu0 %v531
        %v556 = vpop.f32.mrf.mxu0
        %v557 = vadd.f32 0.0, %v556
        %v558 = vpop.f32.mrf.mxu0
        %v559 = vadd.f32 0.0, %v558
        %560 = vdwg.mxu0
        %v561 = vmul.f32 %v543, %v543
        %v562 = vmul.f32 %v545, %v545
        %v563 = vmul.f32 %v557, %v557
        %v564 = vmul.f32 %v559, %v559
        %v565 = vadd.f32 %v561, %v563
        %v566 = vadd.f32 %v562, %v564
        %v567 = vmax.f32 %v565, 1e-18
        %v568 = vmax.f32 %v566, 1e-18
        %v569 = vlog2.pop %v567
        %v570 = vmul.f32 %v569, 0.6931472
        %v571 = vlog2.pop %v568
        %v572 = vmul.f32 %v571, 0.6931472
        %v573 = vmul.f32 %v570, 0.15
        %v574 = vmul.f32 %v572, 0.15
        %v575 = vmul.f32 %v573, 1.442695
        %v576 = vpow.pop %v575
        %v577 = vmul.f32 %v574, 1.442695
        %v578 = vpow.pop %v577
        %v579 = vld [vmem:[%s371] sm:$0xf]
        %v580 = vld [vmem:[%s371 + $0x4] sm:$0xf]
        %v581 = vld [vmem:[%s386] sm:$0xf]
        %v584 = vunpack.c.l.b16 %v579
        %v585 = vunpack.c.l.b16 %v580
        %v586 = vpack.c.b16 %v585, %v584
        %v588 = vunpack.c.l.bf16 %v586
        %v589 = vunpack.c.h.bf16 %v586
        %v590 = vunpack.c.l.bf16 %v581
        %v594 = vrot.slane %v588, 1
        %v595 = vrot.slane %v589, 1
        %v596 = vsel %vm443, %v594, %v595
        %v597 = vrot.slane %v590, 1
        %v598 = vsel %vm443, %v595, %v597
        %599 = vrot.lane.b32.xlu0 %v596, 16
        %v600 = vpop.permute.xlu0 %599
        %601 = vrot.lane.b32.xlu0 %v598, 16
        %v602 = vpop.permute.xlu0 %601
        %v605 = vrot.slane %v588, 2
        %v606 = vrot.slane %v589, 2
        %v607 = vsel %vm455, %v605, %v606
        %v608 = vrot.slane %v590, 2
        %v609 = vsel %vm455, %v606, %v608
        %610 = vrot.lane.b32.xlu0 %v607, 32
        %v611 = vpop.permute.xlu0 %610
        %612 = vrot.lane.b32.xlu0 %v609, 32
        %v613 = vpop.permute.xlu0 %612
        %v616 = vrot.slane %v588, 3
        %v617 = vrot.slane %v589, 3
        %v618 = vsel %vm467, %v616, %v617
        %v619 = vrot.slane %v590, 3
        %v620 = vsel %vm467, %v617, %v619
        %621 = vrot.lane.b32.xlu0 %v618, 48
        %v622 = vpop.permute.xlu0 %621
        %623 = vrot.lane.b32.xlu0 %v620, 48
        %v624 = vpop.permute.xlu0 %623
        %v627 = vsel %vm479, %v588, %v600
        %v628 = vsel %vm479, %v589, %v602
        %v629 = vsel %vm482, %v627, %v611
        %v630 = vsel %vm482, %v628, %v613
        %v631 = vsel %vm485, %v629, %v622
        %v632 = vsel %vm485, %v630, %v624
        %v633 = vpack.c.bf16 %v632, %v631
        %v635 = vsel %vm529, %v633, 0
        %637 = vmatpush.bf16.msra.mxu0 0
        %638 = vmatpush.bf16.msra.mxu0 0
        %639 = vmatpush.bf16.msra.mxu0 0
        %640 = vmatpush.bf16.msra.mxu0 0
        %641 = vmatpush.bf16.msra.mxu0 %v519
        %642 = vmatpush.bf16.msra.mxu0 %v517
        %643 = vmatpush.bf16.msra.mxu0 %v515
        %644 = vmatpush.bf16.msra.mxu0 %v513
        %645 = vmatmul.bf16.gmra.mxu0 %v635
        %v646 = vpop.f32.mrf.mxu0
        %v647 = vadd.f32 0.0, %v646
        %v648 = vpop.f32.mrf.mxu0
        %v649 = vadd.f32 0.0, %v648
        %650 = vdwg.mxu0
        %651 = vmatpush.bf16.msra.mxu0 0
        %652 = vmatpush.bf16.msra.mxu0 0
        %653 = vmatpush.bf16.msra.mxu0 0
        %654 = vmatpush.bf16.msra.mxu0 0
        %655 = vmatpush.bf16.msra.mxu0 %v520
        %656 = vmatpush.bf16.msra.mxu0 %v518
        %657 = vmatpush.bf16.msra.mxu0 %v516
        %658 = vmatpush.bf16.msra.mxu0 %v514
        %659 = vmatmul.bf16.gmra.mxu0 %v635
        %v660 = vpop.f32.mrf.mxu0
        %v661 = vadd.f32 0.0, %v660
        %v662 = vpop.f32.mrf.mxu0
        %v663 = vadd.f32 0.0, %v662
        %664 = vdwg.mxu0
        %v665 = vmul.f32 %v647, %v647
        %v666 = vmul.f32 %v649, %v649
        %v667 = vmul.f32 %v661, %v661
        %v668 = vmul.f32 %v663, %v663
        %v669 = vadd.f32 %v665, %v667
        %v670 = vadd.f32 %v666, %v668
        %v671 = vmax.f32 %v669, 1e-18
        %v672 = vmax.f32 %v670, 1e-18
        %v673 = vlog2.pop %v671
        %v674 = vmul.f32 %v673, 0.6931472
        %v675 = vlog2.pop %v672
        %v676 = vmul.f32 %v675, 0.6931472
        %v677 = vmul.f32 %v674, 0.15
        %v678 = vmul.f32 %v676, 0.15
        %v679 = vmul.f32 %v677, 1.442695
        %v680 = vpow.pop %v679
        %v681 = vmul.f32 %v678, 1.442695
        %v682 = vpow.pop %v681
        %v683 = vsub.f32 %v576, %v680
        %v684 = vsub.f32 %v578, %v682
        %v685 = vmul.f32 %v683, %v683
        %v686 = vmul.f32 %v684, %v684
        %687 = vmatpush.xpose.msra.mxu0 0.0
        %688 = vmatpush.xpose.msra.mxu0 0.0
        %689 = vmatpush.xpose.msra.mxu0 0.0
        %690 = vmatpush.xpose.msra.mxu0 0.0
        %691 = vmatpush.xpose.msra.mxu0 0.0
        %692 = vmatpush.xpose.msra.mxu0 0.0
        %693 = vmatpush.xpose.msra.mxu0 0.0
        %694 = vmatpush.xpose.msra.mxu0 0.0
        %695 = vmatpush.xpose.msra.mxu0 0.0
        %696 = vmatpush.xpose.msra.mxu0 0.0
        %697 = vmatpush.xpose.msra.mxu0 0.0
        %698 = vmatpush.xpose.msra.mxu0 0.0
        %699 = vmatpush.xpose.msra.mxu0 0.0
        %700 = vmatpush.xpose.msra.mxu0 0.0
        %701 = vmatpush.xpose.msra.mxu0 %v686
        %702 = vmatpush.xpose.msra.mxu0 %v685
        %703 = vmatmul.f32.gmra.mxu0 0.030303031
        %v704 = vpop.f32.mrf.mxu0
        %v705 = vadd.f32 0.0, %v704
        %706 = vdwg.mxu0
        %v707 = vperm.slane %v705, 0
        %708 = vst.msk [vmem:[%s358] sm:$0xff] %vm479, %v707
        %s709 = sand.u32 %s182, 1
        %s710 = scalar_lea.sflag [#allocation3], %s709
        %s711 = sand.u32 %s182, 1
        %s712 = smul.addr %s711, 8
        %s713 = scalar_lea.vmem [#allocation2], %s712
        // Predicated region
        $region41: #{tpu_custom_call.1} parent=39 // pred_check
          %p714 = pneg %p192
        $region42: #{tpu_custom_call.1} parent=39 // pred_check_branch
          %716 = sbr.rel (%p714) target = $region44
        $region43: #{tpu_custom_call.1} parent=39 // pred_region
          %718 = vsyncadd %s710, 0
          %s719 = sadd.s32 %s24, %s23
          %s720 = smul.addr %s719, 8
          %s721 = scalar_lea.hbm %s5, %s720
          %s723 = sshll.u32 %s713, 4
          %s724 = int_to_ptr.vmem [resolvable:$true] %s723
          %s725 = sshll.u32 %s721, 4
          %s726 = int_to_ptr.hbm [resolvable:$true] %s725
          %728 = dma.vmem_to_hbm [thread:$0]  %s724, 128, %s726, %s710
        $region44: #{tpu_custom_call.1} parent=39 // pred_fallthru
          _
      $region40: #{tpu_custom_call.1} parent=5 // pred_fallthru
        _
      %p729 = scmp.le.s32.totalorder 2, %s14
      // Predicated region
      $region45: #{tpu_custom_call.1} parent=5 // pred_check
        %p730 = pneg %p729
      $region46: #{tpu_custom_call.1} parent=5 // pred_check_branch
        %732 = sbr.rel (%p730) target = $region48
      $region47: #{tpu_custom_call.1} parent=5 // pred_region
        %s733 = ssub.s32 %s14, 2
        // Predicated region
        $region49: #{tpu_custom_call.1} parent=47 // pred_check
          %p734 = pneg %p198
        $region50: #{tpu_custom_call.1} parent=47 // pred_check_branch
          %736 = sbr.rel (%p734) target = $region52
        $region51: #{tpu_custom_call.1} parent=47 // pred_region
          %s737 = sand.u32 %s183, 1
          %s738 = scalar_lea.sflag [#allocation3], %s737
          %s739 = sand.u32 %s183, 1
          %s740 = smul.addr %s739, 8
          %s741 = scalar_lea.vmem [#allocation2], %s740
          %743 = dma.done %s738, 128
        $region52: #{tpu_custom_call.1} parent=47 // pred_fallthru
          _
      $region48: #{tpu_custom_call.1} parent=5 // pred_fallthru
        _
    $region6: #{tpu_custom_call.1} parent=1 // loop_footer
      %s18 = sadd.s32 1, %s14
    $region7: #{tpu_custom_call.1} parent=1 // loop_footer_branch
      %13 = sbr.rel target = $region3
    $region8: #{tpu_custom_call.1} parent=1 // loop_exit
      _
    %744 = vsyncpa [#allocation3], 1
    %s745 = scalar_lea.sflag [#allocation3], 1
    %746 = vsyncpa %s745, 1

</llo_original>
